<compile_context>
chip_gen: v7x
topology: tpu7x:2x2x1
jax: 0.10.0
libtpu: 0.0.40
codegen_flags: <defaults>
</compile_context>

<pallas_src>
import functools

import jax
import jax.numpy as jnp
from jax.experimental import pallas as pl
from jax.experimental.pallas import tpu as pltpu

EPS = 1e-06
_NEG_BIG = -1e30   # pi pad-lane bias: exp underflows to exactly 0 in the softmax


def _round_up(x, m):
    return ((x + m - 1) // m) * m


# ----------------------------------------------------------------------------
# Kernel
# ----------------------------------------------------------------------------
def mdn_kernel(x_ref, w_ref, b_ref, pi_ref, mu_ref, sig_ref,
               *, G, GD, G_PAD, GD_PAD):
    """One batch tile.

    x_ref:   (TB, input_dim)
    w_ref:   (input_dim, TOTAL_PAD)   [wpi|pad | wmu|pad | wsig|pad], resident
    b_ref:   (1, TOTAL_PAD)           pi pad lanes hold -1e30
    pi_ref:  (TB, G)
    mu_ref:  (TB, GD)
    sig_ref: (TB, GD)
    """
    x = x_ref[...]
    w = w_ref[...]
    if x.dtype != w.dtype:            # bf16 MXU path: W stored bf16, cast x in-VMEM
        x = x.astype(w.dtype)

    # Single fused MXU matmul, f32 accumulation.
    y = jnp.dot(x, w, preferred_element_type=jnp.float32) + b_ref[...]

    # ---- pi: softmax over the first G_PAD lanes (pad lanes exp -> 0) ----
    logits = y[:, :G_PAD]                               # 128-aligned slice
    m = jnp.max(logits, axis=1, keepdims=True)
    e = jnp.exp(logits - m)
    denom = jnp.sum(e, axis=1, keepdims=True)
    r = pl.reciprocal(denom, approx=True)               # EUP vrcp (free slot)
    r = r * (2.0 - denom * r)                           # 1 Newton step -> f32 accuracy
    pi_ref[...] = (e * r)[:, :G].astype(pi_ref.dtype)

    # ---- mu: identity passthrough ----
    mu_ref[...] = y[:, G_PAD:G_PAD + GD].astype(mu_ref.dtype)

    # ---- sigma: softplus + EPS (matches torch threshold-20 form) ----
    ys = y[:, G_PAD + GD_PAD:G_PAD + GD_PAD + GD]        # 128-aligned start
    sp = jnp.where(ys > 20.0,
                   ys,
                   jnp.log1p(jnp.exp(jnp.minimum(ys, 20.0)))) + EPS
    sig_ref[...] = sp.astype(sig_ref.dtype)


# ----------------------------------------------------------------------------
# Parameter preparation (call ONCE, outside the per-step path)
# ----------------------------------------------------------------------------
def prepare_params(params, num_gaussians, output_dim, *, use_bf16_matmul=False):
    """Fuse the three Linear layers into one lane-padded (W, b) pair."""
    wpi, bpi, wmu, bmu, wsig, bsig = params
    G, D = num_gaussians, output_dim
    GD = G * D
    G_PAD = _round_up(G, 128)
    GD_PAD = _round_up(GD, 128)

    def pad_cols(w, b, width, bias_pad):
        b = b.reshape(1, -1).astype(jnp.float32)
        pc = width - w.shape[1]
        if pc:
            w = jnp.pad(w, ((0, 0), (0, pc)))
            b = jnp.pad(b, ((0, 0), (0, pc)), constant_values=bias_pad)
        return w, b

    wpi_p, bpi_p = pad_cols(wpi, bpi, G_PAD, _NEG_BIG)   # -1e30 -> softmax pad = 0
    wmu_p, bmu_p = pad_cols(wmu, bmu, GD_PAD, 0.0)
    wsig_p, bsig_p = pad_cols(wsig, bsig, GD_PAD, 0.0)

    w = jnp.concatenate([wpi_p, wmu_p, wsig_p], axis=1)
    b = jnp.concatenate([bpi_p, bmu_p, bsig_p], axis=1)
    if use_bf16_matmul:
        w = w.astype(jnp.bfloat16)                       # accumulation stays f32
    return w, b


# ----------------------------------------------------------------------------
# Forward
# ----------------------------------------------------------------------------
def mdn_forward(x, fused_w, fused_b, num_gaussians, output_dim, *, block_b=256):
    """x: (B, input_dim). Returns (pi (B,G), mu (B,G,D), sigma (B,G,D))."""
    B, input_dim = x.shape
    G, D = num_gaussians, output_dim
    GD = G * D
    G_PAD = _round_up(G, 128)
    GD_PAD = _round_up(GD, 128)
    TOTAL_PAD = G_PAD + 2 * GD_PAD
    assert fused_w.shape == (input_dim, TOTAL_PAD)
    assert fused_b.shape == (1, TOTAL_PAD)

    # Batch tile: bf16 packs two rows/sublane -> multiple of 16; cap near B/2 so
    # the parallel batch axis has >=2 grid steps for v7x's two TensorCores.
    bf16_in = (x.dtype == jnp.bfloat16) or (fused_w.dtype == jnp.bfloat16)
    mult = 16 if bf16_in else 8
    tb_cap = _round_up(pl.cdiv(B, 2), mult) if B > mult else _round_up(B, mult)
    TB = max(mult, min(_round_up(block_b, mult), tb_cap))

    x_isz = jnp.dtype(x.dtype).itemsize
    w_isz = jnp.dtype(fused_w.dtype).itemsize

    def vmem_bytes(tb):
        x_b = 2 * tb * input_dim * x_isz                 # double-buffered x
        out_b = 2 * tb * (G + 2 * GD) * 4                # double-buffered outputs
        w_b = input_dim * TOTAL_PAD * w_isz + TOTAL_PAD * 4   # resident W + b
        tmp_b = 4 * tb * TOTAL_PAD * 4                   # y + softmax/softplus temps
        return x_b + out_b + w_b + tmp_b

    # Keep the footprint under ~40 MiB (headroom on v7x's 64 MiB physical VMEM).
    VMEM_BUDGET = 40 * 1024 * 1024
    while TB > mult and vmem_bytes(TB) > VMEM_BUDGET:
        TB = max(mult, _round_up(TB // 2, mult))
    vmem_limit = int(min(64 * 1024 * 1024,
                         max(32 * 1024 * 1024, int(1.5 * vmem_bytes(TB)))))

    grid = (pl.cdiv(B, TB),)   # partial last block: OOB rows are masked on store
    kernel = functools.partial(mdn_kernel, G=G, GD=GD, G_PAD=G_PAD, GD_PAD=GD_PAD)

    cost = pl.CostEstimate(
        flops=2 * B * input_dim * TOTAL_PAD,
        transcendentals=B * (G_PAD + 2 * GD),            # exp(pi) + (exp+log1p)(sigma)
        bytes_accessed=(B * input_dim * x_isz
                        + input_dim * TOTAL_PAD * w_isz
                        + TOTAL_PAD * 4
                        + B * (G + 2 * GD) * 4),
    )

    pi, mu_flat, sig_flat = pl.pallas_call(
        kernel,
        out_shape=(jax.ShapeDtypeStruct((B, G), jnp.float32),
                   jax.ShapeDtypeStruct((B, GD), jnp.float32),
                   jax.ShapeDtypeStruct((B, GD), jnp.float32)),
        grid=grid,
        in_specs=[
            pl.BlockSpec((TB, input_dim), lambda i: (i, 0)),        # x: batch-tiled
            pl.BlockSpec((input_dim, TOTAL_PAD), lambda i: (0, 0)),  # W: VMEM-resident
            pl.BlockSpec((1, TOTAL_PAD), lambda i: (0, 0)),          # b: VMEM-resident
        ],
        out_specs=(pl.BlockSpec((TB, G), lambda i: (i, 0)),
                   pl.BlockSpec((TB, GD), lambda i: (i, 0)),
                   pl.BlockSpec((TB, GD), lambda i: (i, 0))),
        compiler_params=pltpu.CompilerParams(
            dimension_semantics=("parallel",),
            vmem_limit_bytes=vmem_limit),
        cost_estimate=cost,
    )(x, fused_w, fused_b)

    # Contiguous reshapes only — no non-aligned column slicing in the wrapper.
    return pi, mu_flat.reshape(B, G, D), sig_flat.reshape(B, G, D)


# ----------------------------------------------------------------------------
# Init / reference / check
# ----------------------------------------------------------------------------
def init_params(key, input_dim, output_dim, num_gaussians):
    """Deterministic PyTorch-Linear-style init: U(-1/sqrt(in), 1/sqrt(in))."""
    GD = output_dim * num_gaussians
    bound = 1.0 / (input_dim ** 0.5)
    ks = jax.random.split(key, 6)
    u = lambda k, shape: jax.random.uniform(k, shape, jnp.float32, -bound, bound)
    return (u(ks[0], (input_dim, num_gaussians)), u(ks[1], (1, num_gaussians)),
            u(ks[2], (input_dim, GD)), u(ks[3], (1, GD)),
            u(ks[4], (input_dim, GD)), u(ks[5], (1, GD)))


def mdn_reference(x, params, num_gaussians, output_dim):
    """Pure-JAX reference for correctness check."""
    wpi, bpi, wmu, bmu, wsig, bsig = params
    pi = jax.nn.softmax(x @ wpi + bpi, axis=1)
    mu = (x @ wmu + bmu).reshape(-1, num_gaussians, output_dim)
    sigma = (jax.nn.softplus(x @ wsig + bsig) + EPS).reshape(
        -1, num_gaussians, output_dim)
    return pi, mu, sigma


def _check(B, input_dim, output_dim, num_gaussians, block_b, seed,
           use_bf16_matmul=False, atol=1e-5, rtol=1e-5):
    key = jax.random.PRNGKey(seed)
    kx, kp = jax.random.split(key)
    x = jax.random.normal(kx, (B, input_dim), jnp.float32)
    params = init_params(kp, input_dim, output_dim, num_gaussians)

    fused_w, fused_b = prepare_params(params, num_gaussians, output_dim,
                                      use_bf16_matmul=use_bf16_matmul)
    pi, mu, sigma = mdn_forward(x, fused_w, fused_b, num_gaussians, output_dim,
                                block_b=block_b)
    jax.block_until_ready((pi, mu, sigma))

    pi_r, mu_r, sigma_r = mdn_reference(x, params, num_gaussians, output_dim)
    assert pi.shape == (B, num_gaussians)
    assert mu.shape == (B, num_gaussians, output_dim)
    assert sigma.shape == (B, num_gaussians, output_dim)
    assert jnp.allclose(pi, pi_r, atol=atol, rtol=rtol)
    assert jnp.allclose(mu, mu_r, atol=atol, rtol=rtol)
    assert jnp.allclose(sigma, sigma_r, atol=atol, rtol=rtol)


if __name__ == "__main__":
    # Small shape consistent with the module spec (f32, tight tolerance).
    _check(B=8, input_dim=32, output_dim=8, num_gaussians=4, block_b=256, seed=0)
    # Multi-tile / ragged-batch path (grid > 1, Pallas-masked partial block).
    _check(B=300, input_dim=32, output_dim=8, num_gaussians=4, block_b=128, seed=0)
    # bf16-matmul path (f32 accumulation), relaxed tolerance.
    _check(B=300, input_dim=32, output_dim=8, num_gaussians=4, block_b=128, seed=0,
           use_bf16_matmul=True, atol=5e-2, rtol=5e-2)

    print("KERNEL_OK")
</pallas_src>

<mosaic_0001>
module attributes {stable_mosaic.version = 11 : i64} {
  func.func @mdn_kernel(%arg0: i32, %arg1: memref<8x32xf32, #tpu.memory_space<vmem>>, %arg2: memref<32x384xf32, #tpu.memory_space<vmem>>, %arg3: memref<1x384xf32, #tpu.memory_space<vmem>>, %arg4: memref<8x4xf32, #tpu.memory_space<vmem>>, %arg5: memref<8x32xf32, #tpu.memory_space<vmem>>, %arg6: memref<8x32xf32, #tpu.memory_space<vmem>>) attributes {dimension_semantics = [#tpu.dimension_semantics<parallel>], iteration_bounds = array<i64: 1>, scalar_prefetch = 0 : i64, scratch_operands = 0 : i64, tpu.core_type = #tpu.core_type<tc>, window_params = [{transform_indices = @transform_0, window_bounds = array<i64: 8, 32>}, {pipeline_mode = #tpu.pipeline_mode<synchronous>, transform_indices = @transform_1, window_bounds = array<i64: 32, 384>}, {pipeline_mode = #tpu.pipeline_mode<synchronous>, transform_indices = @transform_2, window_bounds = array<i64: 1, 384>}, {transform_indices = @transform_3, window_bounds = array<i64: 8, 4>}, {transform_indices = @transform_4, window_bounds = array<i64: 8, 32>}, {transform_indices = @transform_5, window_bounds = array<i64: 8, 32>}]} {
    %c0 = arith.constant 0 : index
    %c0_0 = arith.constant 0 : index
    %0 = vector.load %arg1[%c0, %c0_0] : memref<8x32xf32, #tpu.memory_space<vmem>>, vector<8x32xf32>
    %c0_1 = arith.constant 0 : index
    %c0_2 = arith.constant 0 : index
    %1 = vector.load %arg2[%c0_1, %c0_2] : memref<32x384xf32, #tpu.memory_space<vmem>>, vector<32x384xf32>
    %cst = arith.constant dense<0.000000e+00> : vector<8x384xf32>
    %2 = tpu.matmul %0, %1, %cst {dimension_numbers = #tpu.dot_dimension_numbers<[1], [0], [0], [1], [0, 0, 1, 1], [], []>} : vector<8x32xf32>, vector<32x384xf32>, vector<8x384xf32> -> vector<8x384xf32>
    %c0_3 = arith.constant 0 : index
    %c0_4 = arith.constant 0 : index
    %3 = vector.load %arg3[%c0_3, %c0_4] : memref<1x384xf32, #tpu.memory_space<vmem>>, vector<1x384xf32>
    %4 = vector.broadcast %3 : vector<1x384xf32> to vector<8x384xf32>
    %5 = arith.addf %2, %4 : vector<8x384xf32>
    %6 = vector.extract_strided_slice %5 {offsets = [0, 0], sizes = [8, 128], strides = [1, 1]} : vector<8x384xf32> to vector<8x128xf32>
    %cst_5 = arith.constant dense<0xFF800000> : vector<8xf32>
    %7 = vector.multi_reduction <maximumf>, %6, %cst_5 [1] : vector<8x128xf32> to vector<8xf32>
    %8 = vector.shape_cast %7 : vector<8xf32> to vector<8x1xf32>
    %9 = vector.broadcast %8 : vector<8x1xf32> to vector<8x128xf32>
    %10 = arith.subf %6, %9 : vector<8x128xf32>
    %11 = math.exp %10 : vector<8x128xf32>
    %cst_6 = arith.constant dense<0.000000e+00> : vector<8xf32>
    %12 = vector.multi_reduction <add>, %11, %cst_6 [1] : vector<8x128xf32> to vector<8xf32>
    %13 = vector.shape_cast %12 : vector<8xf32> to vector<8x1xf32>
    %14 = tpu.reciprocal %13 {approx = true} : vector<8x1xf32> -> vector<8x1xf32>
    %15 = arith.mulf %13, %14 : vector<8x1xf32>
    %cst_7 = arith.constant 2.000000e+00 : f32
    %16 = vector.broadcast %cst_7 : f32 to vector<8x1xf32>
    %17 = arith.subf %16, %15 : vector<8x1xf32>
    %18 = arith.mulf %14, %17 : vector<8x1xf32>
    %19 = vector.broadcast %18 : vector<8x1xf32> to vector<8x128xf32>
    %20 = arith.mulf %11, %19 : vector<8x128xf32>
    %21 = vector.extract_strided_slice %20 {offsets = [0, 0], sizes = [8, 4], strides = [1, 1]} : vector<8x128xf32> to vector<8x4xf32>
    %c0_8 = arith.constant 0 : index
    %c0_9 = arith.constant 0 : index
    %22 = vector.load %arg4[%c0_8, %c0_9] : memref<8x4xf32, #tpu.memory_space<vmem>>, vector<8x4xf32>
    tpu.vector_store %arg4[%c0_8, %c0_9], %21 {strides = array<i32>} : memref<8x4xf32, #tpu.memory_space<vmem>>, vector<8x4xf32>,
    %23 = vector.extract_strided_slice %5 {offsets = [0, 128], sizes = [8, 32], strides = [1, 1]} : vector<8x384xf32> to vector<8x32xf32>
    %c0_10 = arith.constant 0 : index
    %c0_11 = arith.constant 0 : index
    %24 = vector.load %arg5[%c0_10, %c0_11] : memref<8x32xf32, #tpu.memory_space<vmem>>, vector<8x32xf32>
    tpu.vector_store %arg5[%c0_10, %c0_11], %23 {strides = array<i32>} : memref<8x32xf32, #tpu.memory_space<vmem>>, vector<8x32xf32>,
    %25 = vector.extract_strided_slice %5 {offsets = [0, 256], sizes = [8, 32], strides = [1, 1]} : vector<8x384xf32> to vector<8x32xf32>
    %cst_12 = arith.constant 2.000000e+01 : f32
    %26 = vector.broadcast %cst_12 : f32 to vector<8x32xf32>
    %27 = arith.cmpf ogt, %25, %26 : vector<8x32xf32>
    %cst_13 = arith.constant 2.000000e+01 : f32
    %28 = vector.broadcast %cst_13 : f32 to vector<8x32xf32>
    %29 = arith.minimumf %25, %28 : vector<8x32xf32>
    %30 = math.exp %29 : vector<8x32xf32>
    %31 = math.log1p %30 : vector<8x32xf32>
    %32 = arith.select %27, %25, %31 : vector<8x32xi1>, vector<8x32xf32>
    %cst_14 = arith.constant 9.99999997E-7 : f32
    %33 = vector.broadcast %cst_14 : f32 to vector<8x32xf32>
    %34 = arith.addf %32, %33 : vector<8x32xf32>
    %c0_15 = arith.constant 0 : index
    %c0_16 = arith.constant 0 : index
    %35 = vector.load %arg6[%c0_15, %c0_16] : memref<8x32xf32, #tpu.memory_space<vmem>>, vector<8x32xf32>
    tpu.vector_store %arg6[%c0_15, %c0_16], %34 {strides = array<i32>} : memref<8x32xf32, #tpu.memory_space<vmem>>, vector<8x32xf32>,
    return
  }
  func.func @transform_0(%arg0: i32) -> (i32, i32) {
    %c0_i32 = arith.constant 0 : i32
    %c0_i32_0 = arith.constant 0 : i32
    return %arg0, %c0_i32 : i32, i32
  }
  func.func @transform_1(%arg0: i32) -> (i32, i32) {
    %c0_i32 = arith.constant 0 : i32
    %c0_i32_0 = arith.constant 0 : i32
    %c0_i32_1 = arith.constant 0 : i32
    return %c0_i32, %c0_i32_0 : i32, i32
  }
  func.func @transform_2(%arg0: i32) -> (i32, i32) {
    %c0_i32 = arith.constant 0 : i32
    %c0_i32_0 = arith.constant 0 : i32
    %c0_i32_1 = arith.constant 0 : i32
    return %c0_i32, %c0_i32_0 : i32, i32
  }
  func.func @transform_3(%arg0: i32) -> (i32, i32) {
    %c0_i32 = arith.constant 0 : i32
    %c0_i32_0 = arith.constant 0 : i32
    return %arg0, %c0_i32 : i32, i32
  }
  func.func @transform_4(%arg0: i32) -> (i32, i32) {
    %c0_i32 = arith.constant 0 : i32
    %c0_i32_0 = arith.constant 0 : i32
    return %arg0, %c0_i32 : i32, i32
  }
  func.func @transform_5(%arg0: i32) -> (i32, i32) {
    %c0_i32 = arith.constant 0 : i32
    %c0_i32_0 = arith.constant 0 : i32
    return %arg0, %c0_i32 : i32, i32
  }
}

</mosaic_0001>

<llo_original>
// kernel: tpu_custom_call.1
$region0: #{tpu_custom_call.1}
  #allocation0 [shape = 'u32[]', space=smem, size = 0x4, offset = 0x4, fixed_abs, tag = 'smem constant byte address 0x4 - core index']
  #allocation1 [shape = 'u32[144,128]{1,0:T(1,128)}', space=vmem, size = 0x12000, scoped, tag = 'internal scratch']
  %s0 = inlined_call_operand.hbm [shape: f32[8,32], index: 0, kind: input, shape index: {}]
  %s1 = inlined_call_operand.hbm [shape: f32[32,384], index: 1, kind: input, shape index: {}]
  %s2 = inlined_call_operand.vmem [shape: f32[1,384], index: 2, kind: input, shape index: {}]
  %s3 = inlined_call_operand.vmem [shape: f32[8,4], index: 3, kind: output, shape index: {0}]
  %s4 = inlined_call_operand.hbm [shape: f32[8,32], index: 4, kind: output, shape index: {1}]
  %s5 = inlined_call_operand.hbm [shape: f32[8,32], index: 5, kind: output, shape index: {2}]
  %6 = xla_tuple %s3, %s4, %s5
  %s7 = sld [smem:[#allocation0]]
  $region46: #{tpu_custom_call.1} parent=0
    _
  %s9 = ssub.s32 1, %s7
  %s10 = scalar_select 0, %s9, %s7
  $region1: #{tpu_custom_call.1} parent=0
    #allocation2 [shape = 'u8[4096]{0}', space=vmem, size = 0x1000, scoped, tag = 'input window, operand 0, single buffered']
    #allocation3 [shape = 's32[1]{0}', space=sflag, size = 0x4, scoped, tag = 'scoped memory for tpu_custom_call.1']
    #allocation4 [shape = 's32[1]{0}', space=sflag, size = 0x4, scoped, tag = 'scoped memory for tpu_custom_call.1']
    #allocation5 [shape = 'u8[49152]{0}', space=vmem, size = 0xc000, scoped, tag = 'input window, operand 1, single buffered']
    #allocation6 [shape = 's32[1]{0}', space=sflag, size = 0x4, scoped, tag = 'scoped memory for tpu_custom_call.1']
    #allocation7 [shape = 'u8[4096]{0}', space=vmem, size = 0x1000, scoped, tag = 'output window, operand 1, single buffered']
    #allocation8 [shape = 'u8[4096]{0}', space=vmem, size = 0x1000, scoped, tag = 'output window, operand 2, single buffered']
    #allocation9 [shape = 's32[1]{0}', space=sflag, size = 0x4, scoped, tag = 'scoped memory for tpu_custom_call.1']
    %11 = vsyncpa [#allocation3], 0
    %12 = vsyncpa [#allocation6], 0
    %13 = vsyncpa [#allocation4], 0
    %14 = vsyncpa [#allocation9], 0
    // Predicated region
    $region2: #{tpu_custom_call.1} parent=1 // pred_check
      _
    $region3: #{tpu_custom_call.1} parent=1 // pred_check_branch
      %16 = sbr.rel (0) target = $region5
    $region4: #{tpu_custom_call.1} parent=1 // pred_region
      %s18 = ssub.s32 128, 128
      %19 = vsyncadd [#allocation3], %s18
      %s21 = sshll.u32 [#allocation2], 4
      %s22 = int_to_ptr.vmem [resolvable:$true] %s21
      %24 = dma.hbm_to_vmem [thread:$0]  %s0, 128, %s22, [#allocation3]
    $region5: #{tpu_custom_call.1} parent=1 // pred_fallthru
      _
    // Predicated region
    $region6: #{tpu_custom_call.1} parent=1 // pred_check
      _
    $region7: #{tpu_custom_call.1} parent=1 // pred_check_branch
      %26 = sbr.rel (0) target = $region9
    $region8: #{tpu_custom_call.1} parent=1 // pred_region
      %s28 = ssub.s32 1536, 1536
      %29 = vsyncadd [#allocation6], %s28
      %s30 = sshll.u32 [#allocation5], 4
      %s31 = int_to_ptr.vmem [resolvable:$true] %s30
      %36 = dma.hbm_to_vmem [thread:$0]  %s1, 1536, %s31, [#allocation6], 384, 384, 24
    $region9: #{tpu_custom_call.1} parent=1 // pred_fallthru
      _
    // Predicated region
    $region10: #{tpu_custom_call.1} parent=1 // pred_check
      _
    $region11: #{tpu_custom_call.1} parent=1 // pred_check_branch
      %38 = sbr.rel (0) target = $region13
    $region12: #{tpu_custom_call.1} parent=1 // pred_region
      _
    $region13: #{tpu_custom_call.1} parent=1 // pred_fallthru
      _
    // Predicated region
    $region14: #{tpu_custom_call.1} parent=1 // pred_check
      _
    $region15: #{tpu_custom_call.1} parent=1 // pred_check_branch
      %40 = sbr.rel (0) target = $region17
    $region16: #{tpu_custom_call.1} parent=1 // pred_region
      %41 = dma.done [#allocation3], 128
    $region17: #{tpu_custom_call.1} parent=1 // pred_fallthru
      _
    // Predicated region
    $region18: #{tpu_custom_call.1} parent=1 // pred_check
      _
    $region19: #{tpu_custom_call.1} parent=1 // pred_check_branch
      %43 = sbr.rel (0) target = $region21
    $region20: #{tpu_custom_call.1} parent=1 // pred_region
      %44 = dma.done [#allocation6], 1536
    $region21: #{tpu_custom_call.1} parent=1 // pred_fallthru
      _
    %v45 = vld [vmem:[#allocation2] sm:$0xff]
    %v46 = vld [vmem:[#allocation5] sm:$0xff]
    %v47 = vld [vmem:[#allocation5 + $0x8] sm:$0xff]
    %v48 = vld [vmem:[#allocation5 + $0x10] sm:$0xff]
    %v49 = vld [vmem:[#allocation5 + $0x18] sm:$0xff]
    %v50 = vld [vmem:[#allocation5 + $0x20] sm:$0xff]
    %v51 = vld [vmem:[#allocation5 + $0x28] sm:$0xff]
    %v52 = vld [vmem:[#allocation5 + $0x30] sm:$0xff]
    %v53 = vld [vmem:[#allocation5 + $0x38] sm:$0xff]
    %v54 = vld [vmem:[#allocation5 + $0x40] sm:$0xff]
    %v55 = vld [vmem:[#allocation5 + $0x48] sm:$0xff]
    %v56 = vld [vmem:[#allocation5 + $0x50] sm:$0xff]
    %v57 = vld [vmem:[#allocation5 + $0x58] sm:$0xff]
    %v58 = vld [vmem:[%s2] sm:$0x7]
    %v60 = vlaneseq
    %v61 = vshrl.u32 %v60, 7
    %v62 = vsub.s32 0, %v61
    %v63 = vrot.slane %v58, %v62
    %v64 = vlaneseq
    %v65 = vshrl.u32 %v64, 7
    %v66 = vsub.s32 1, %v65
    %v67 = vrot.slane %v58, %v66
    %v68 = vlaneseq
    %v69 = vshrl.u32 %v68, 7
    %v70 = vsub.s32 2, %v69
    %v71 = vrot.slane %v58, %v70
    %vm75 = vcmask 261120
    %v77 = vsel %vm75, %v45, 0
    %79 = vmatprep.subr.mxu0 %v47
    %80 = vmatpush1.msra.mxu0 %v46
    %81 = vmatprep.subr.mxu0 %v50
    %82 = vmatpush1.msra.mxu0 %v49
    %83 = vmatprep.subr.mxu0 %v53
    %84 = vmatpush1.msra.mxu0 %v52
    %85 = vmatprep.subr.mxu0 %v56
    %86 = vmatpush1.msra.mxu0 %v55
    %87 = vmatprep.subr.mxu0 0.0
    %88 = vmatpush1.msra.mxu0 0.0
    %89 = vmatprep.subr.mxu0 0.0
    %90 = vmatpush1.msra.mxu0 0.0
    %91 = vmatprep.subr.mxu0 0.0
    %92 = vmatpush1.msra.mxu0 0.0
    %93 = vmatprep.subr.mxu0 0.0
    %94 = vmatpush1.msra.mxu0 0.0
    %95 = vmatprep.subr.mxu0 0.0
    %96 = vmatpush1.msra.mxu0 0.0
    %97 = vmatprep.subr.mxu0 0.0
    %98 = vmatpush1.msra.mxu0 0.0
    %99 = vmatprep.subr.mxu0 0.0
    %100 = vmatpush1.msra.mxu0 0.0
    %101 = vmatprep.subr.mxu0 0.0
    %102 = vmatpush1.msra.mxu0 0.0
    %103 = vmatprep.subr.mxu0 0.0
    %104 = vmatpush1.msra.mxu0 0.0
    %105 = vmatprep.subr.mxu0 0.0
    %106 = vmatpush1.msra.mxu0 0.0
    %107 = vmatprep.subr.mxu0 0.0
    %108 = vmatpush1.msra.mxu0 0.0
    %109 = vmatprep.subr.mxu0 0.0
    %110 = vmatpush1.msra.mxu0 0.0
    %111 = vmatprep.subr.mxu0 0.0
    %112 = vmatpush1.msra.mxu0 0.0
    %113 = vmatprep.subr.mxu0 0.0
    %114 = vmatpush1.msra.mxu0 0.0
    %115 = vmatprep.subr.mxu0 0.0
    %116 = vmatpush1.msra.mxu0 0.0
    %117 = vmatprep.subr.mxu0 0.0
    %118 = vmatpush1.msra.mxu0 0.0
    %119 = vmatprep.subr.mxu0 0.0
    %120 = vmatpush1.msra.mxu0 0.0
    %121 = vmatprep.subr.mxu0 0.0
    %122 = vmatpush1.msra.mxu0 0.0
    %123 = vmatprep.subr.mxu0 0.0
    %124 = vmatpush1.msra.mxu0 0.0
    %125 = vmatprep.subr.mxu0 0.0
    %126 = vmatpush1.msra.mxu0 0.0
    %127 = vmatprep.subr.mxu0 0.0
    %128 = vmatpush1.msra.mxu0 0.0
    %129 = vmatprep.subr.mxu0 0.0
    %130 = vmatpush1.msra.mxu0 0.0
    %131 = vmatprep.subr.mxu0 0.0
    %132 = vmatpush1.msra.mxu0 0.0
    %133 = vmatprep.subr.mxu0 0.0
    %134 = vmatpush1.msra.mxu0 0.0
    %135 = vmatprep.subr.mxu0 0.0
    %136 = vmatpush1.msra.mxu0 0.0
    %137 = vmatprep.subr.mxu0 0.0
    %138 = vmatpush1.msra.mxu0 0.0
    %139 = vmatprep.subr.mxu0 0.0
    %140 = vmatpush1.msra.mxu0 0.0
    %141 = vmatprep.subr.mxu0 0.0
    %142 = vmatpush1.msra.mxu0 0.0
    %143 = vmatprep.mubr.f32.mxu0 0.0
    %144 = vmatmul.mubr.f32.gmra.mrb[0].mxu0 %v77
    %v145 = vpop.f32.mrb[0].mxu0
    %v146 = vadd.f32 %v63, %v145
    %v147 = vpop.f32.mrb[0].mxu0
    %v148 = vadd.f32 %v67, %v147
    %149 = vdwg.mxu0
    %150 = vmatprep.subr.mxu0 0.0
    %151 = vmatpush1.msra.mxu0 %v48
    %152 = vmatprep.subr.mxu0 0.0
    %153 = vmatpush1.msra.mxu0 %v51
    %154 = vmatprep.subr.mxu0 0.0
    %155 = vmatpush1.msra.mxu0 %v54
    %156 = vmatprep.subr.mxu0 0.0
    %157 = vmatpush1.msra.mxu0 %v57
    %158 = vmatprep.subr.mxu0 0.0
    %159 = vmatpush1.msra.mxu0 0.0
    %160 = vmatprep.subr.mxu0 0.0
    %161 = vmatpush1.msra.mxu0 0.0
    %162 = vmatprep.subr.mxu0 0.0
    %163 = vmatpush1.msra.mxu0 0.0
    %164 = vmatprep.subr.mxu0 0.0
    %165 = vmatpush1.msra.mxu0 0.0
    %166 = vmatprep.subr.mxu0 0.0
    %167 = vmatpush1.msra.mxu0 0.0
    %168 = vmatprep.subr.mxu0 0.0
    %169 = vmatpush1.msra.mxu0 0.0
    %170 = vmatprep.subr.mxu0 0.0
    %171 = vmatpush1.msra.mxu0 0.0
    %172 = vmatprep.subr.mxu0 0.0
    %173 = vmatpush1.msra.mxu0 0.0
    %174 = vmatprep.subr.mxu0 0.0
    %175 = vmatpush1.msra.mxu0 0.0
    %176 = vmatprep.subr.mxu0 0.0
    %177 = vmatpush1.msra.mxu0 0.0
    %178 = vmatprep.subr.mxu0 0.0
    %179 = vmatpush1.msra.mxu0 0.0
    %180 = vmatprep.subr.mxu0 0.0
    %181 = vmatpush1.msra.mxu0 0.0
    %182 = vmatprep.subr.mxu0 0.0
    %183 = vmatpush1.msra.mxu0 0.0
    %184 = vmatprep.subr.mxu0 0.0
    %185 = vmatpush1.msra.mxu0 0.0
    %186 = vmatprep.subr.mxu0 0.0
    %187 = vmatpush1.msra.mxu0 0.0
    %188 = vmatprep.subr.mxu0 0.0
    %189 = vmatpush1.msra.mxu0 0.0
    %190 = vmatprep.subr.mxu0 0.0
    %191 = vmatpush1.msra.mxu0 0.0
    %192 = vmatprep.subr.mxu0 0.0
    %193 = vmatpush1.msra.mxu0 0.0
    %194 = vmatprep.subr.mxu0 0.0
    %195 = vmatpush1.msra.mxu0 0.0
    %196 = vmatprep.subr.mxu0 0.0
    %197 = vmatpush1.msra.mxu0 0.0
    %198 = vmatprep.subr.mxu0 0.0
    %199 = vmatpush1.msra.mxu0 0.0
    %200 = vmatprep.subr.mxu0 0.0
    %201 = vmatpush1.msra.mxu0 0.0
    %202 = vmatprep.subr.mxu0 0.0
    %203 = vmatpush1.msra.mxu0 0.0
    %204 = vmatprep.subr.mxu0 0.0
    %205 = vmatpush1.msra.mxu0 0.0
    %206 = vmatprep.subr.mxu0 0.0
    %207 = vmatpush1.msra.mxu0 0.0
    %208 = vmatprep.subr.mxu0 0.0
    %209 = vmatpush1.msra.mxu0 0.0
    %210 = vmatprep.subr.mxu0 0.0
    %211 = vmatpush1.msra.mxu0 0.0
    %212 = vmatprep.subr.mxu0 0.0
    %213 = vmatpush1.msra.mxu0 0.0
    %214 = vmatprep.mubr.f32.mxu0 0.0
    %215 = vmatmul.mubr.f32.gmra.mrb[0].mxu0 %v77
    %v216 = vpop.f32.mrb[0].mxu0
    %v217 = vadd.f32 %v71, %v216
    %v218 = vpop.f32.mrb[0].mxu0
    %219 = vdwg.mxu0
    %220 = vmax.xlane.f32.xlu0 %v146
    %v221 = vpop.xlane.xlu0 %220
    %v222 = vsub.f32 %v146, %v221
    %v223 = vmul.f32 %v222, 1.442695
    %v224 = vpow.pop %v223
    %225 = vadd.xlane.f32.xlu0 %v224
    %v226 = vpop.xlane.xlu0 %225
    %v227 = vrcp.pop %v226
    %v228 = vmul.f32 %v226, %v227
    %v229 = vsub.f32 2.0, %v228
    %v230 = vmul.f32 %v227, %v229
    %v231 = vmul.f32 %v224, %v230
    %vm232 = vcmask 31744
    %233 = vst.msk [vmem:[%s3] sm:$0xff] %vm232, %v231
    %234 = vst.msk [vmem:[#allocation7] sm:$0xff] %vm75, %v148
    %vm235 = vcmp.gt.f32.partialorder %v217, 20.0
    %v236 = vmin.f32 %v217, 20.0
    %v237 = vmul.f32 %v236, 1.442695
    %v238 = vpow.pop %v237
    %v239 = vadd.f32 %v238, 1.0
    %v240 = vlog2.pop %v239
    %v241 = vmul.f32 %v240, 0.6931472
    %v242 = vmul.f32 -0.5, %v238
    %v243 = vadd.f32 %v242, 1.0
    %v244 = vmul.f32 %v243, %v238
    %v245 = vand.u32 2147483647, %v238
    %vm246 = vcmp.lt.f32.partialorder %v245, 0.0004427343
    %v247 = vsel %vm246, %v244, %v241
    %v248 = vsel %vm235, %v217, %v247
    %v249 = vadd.f32 %v248, 1e-06
    %250 = vst.msk [vmem:[#allocation8] sm:$0xff] %vm75, %v249
    // Predicated region
    $region22: #{tpu_custom_call.1} parent=1 // pred_check
      _
    $region23: #{tpu_custom_call.1} parent=1 // pred_check_branch
      %252 = sbr.rel (0) target = $region25
    $region24: #{tpu_custom_call.1} parent=1 // pred_region
      _
    $region25: #{tpu_custom_call.1} parent=1 // pred_fallthru
      _
    // Predicated region
    $region26: #{tpu_custom_call.1} parent=1 // pred_check
      _
    $region27: #{tpu_custom_call.1} parent=1 // pred_check_branch
      %254 = sbr.rel (0) target = $region29
    $region28: #{tpu_custom_call.1} parent=1 // pred_region
      %s256 = ssub.s32 128, 128
      %257 = vsyncadd [#allocation4], %s256
      %s259 = sshll.u32 [#allocation7], 4
      %s260 = int_to_ptr.vmem [resolvable:$true] %s259
      %262 = dma.vmem_to_hbm [thread:$0]  %s260, 128, %s4, [#allocation4]
    $region29: #{tpu_custom_call.1} parent=1 // pred_fallthru
      _
    // Predicated region
    $region30: #{tpu_custom_call.1} parent=1 // pred_check
      _
    $region31: #{tpu_custom_call.1} parent=1 // pred_check_branch
      %264 = sbr.rel (0) target = $region33
    $region32: #{tpu_custom_call.1} parent=1 // pred_region
      %s266 = ssub.s32 128, 128
      %267 = vsyncadd [#allocation9], %s266
      %s269 = sshll.u32 [#allocation8], 4
      %s270 = int_to_ptr.vmem [resolvable:$true] %s269
      %272 = dma.vmem_to_hbm [thread:$0]  %s270, 128, %s5, [#allocation9]
    $region33: #{tpu_custom_call.1} parent=1 // pred_fallthru
      _
    // Predicated region
    $region34: #{tpu_custom_call.1} parent=1 // pred_check
      _
    $region35: #{tpu_custom_call.1} parent=1 // pred_check_branch
      %274 = sbr.rel (0) target = $region37
    $region36: #{tpu_custom_call.1} parent=1 // pred_region
      _
    $region37: #{tpu_custom_call.1} parent=1 // pred_fallthru
      _
    // Predicated region
    $region38: #{tpu_custom_call.1} parent=1 // pred_check
      _
    $region39: #{tpu_custom_call.1} parent=1 // pred_check_branch
      %276 = sbr.rel (0) target = $region41
    $region40: #{tpu_custom_call.1} parent=1 // pred_region
      %277 = dma.done [#allocation4], 128
    $region41: #{tpu_custom_call.1} parent=1 // pred_fallthru
      _
    // Predicated region
    $region42: #{tpu_custom_call.1} parent=1 // pred_check
      _
    $region43: #{tpu_custom_call.1} parent=1 // pred_check_branch
      %279 = sbr.rel (0) target = $region45
    $region44: #{tpu_custom_call.1} parent=1 // pred_region
      %280 = dma.done [#allocation9], 128
    $region45: #{tpu_custom_call.1} parent=1 // pred_fallthru
      _
    %281 = vsyncpa [#allocation3], 1
    %282 = vsyncpa [#allocation6], 1
    %283 = vsyncpa [#allocation4], 1
    %284 = vsyncpa [#allocation9], 1

</llo_original>
